<compile_context>
chip_gen: v7x
topology: tpu7x:2x2x1
jax: 0.10.0
libtpu: 0.0.40
codegen_flags: <defaults>
</compile_context>

<pallas_src>
import functools

import jax
import jax.numpy as jnp
from jax import lax
from jax.experimental import pallas as pl
from jax.experimental.pallas import tpu as pltpu


_TARGET_BLOCK_BYTES = 2 * 1024 * 1024   # per-input block (f32 equivalent)
_VMEM_LIMIT_BYTES = 32 * 1024 * 1024    # explicit scoped-VMEM budget (all gens)


def _round_up(x, m):
    return ((x + m - 1) // m) * m


def _tversky_partials_kernel(o_ref, m_ref, acc_ref, *, tile_rows, lane, steps,
                             total):
    p = pl.program_id(0)          # small "parallel" axis (megacore split)
    s = pl.program_id(1)          # reduction steps (arbitrary)
    blk = p * steps + s           # logical global row-block index

    @pl.when(s == 0)
    def _():
        acc_ref[...] = jnp.zeros_like(acc_ref)

    o = jax.nn.sigmoid(o_ref[...].astype(jnp.float32))
    m = m_ref[...].astype(jnp.float32)

    def fold(x):
        # (tile_rows, lane) -> (8, lane) using pure VPU vector adds; the
        # cross-sublane/lane reduce is deferred to the tiny wrapper combine.
        return jnp.sum(x.reshape(tile_rows // 8, 8, lane), axis=0)

    def accumulate(o_v, m_v):
        acc_ref[0] += fold(o_v * m_v)   # partial of sum(sigmoid(x) * m)
        acc_ref[1] += fold(o_v)         # partial of sum(sigmoid(x))
        acc_ref[2] += fold(m_v)         # partial of sum(m)

    full_rows = total // lane           # fully-valid rows of the slab (static)
    rem = total % lane                  # valid lanes in the boundary row

    # Block is entirely valid iff its last row index < full_rows.
    is_full = (blk + 1) * tile_rows <= full_rows

    @pl.when(is_full)
    def _():
        accumulate(o, m)

    @pl.when(jnp.logical_not(is_full))
    def _():
        # Edge / overshoot block: mask everything at or past the true element
        # count (covers Pallas' undefined partial-block region, wrapper pad,
        # and clamped overshoot blocks).  jnp.where (not multiply) so garbage
        # logits can't inject NaNs.
        rid = lax.broadcasted_iota(jnp.int32, (tile_rows, lane), 0)
        row_global = blk * tile_rows + rid
        valid = row_global < full_rows
        if rem:
            cid = lax.broadcasted_iota(jnp.int32, (tile_rows, lane), 1)
            valid = valid | ((row_global == full_rows) & (cid < rem))
        accumulate(jnp.where(valid, o, 0.0), jnp.where(valid, m, 0.0))


def tversky_loss(outputs, masks, alpha=0.2, beta=0.8, smooth=1.0):
    """Pallas TPU Tversky loss.  outputs/masks: same shape, e.g. (N, 1, H, W)."""
    assert outputs.shape == masks.shape
    total = int(outputs.size)

    # Largest lane width that divides total -> no padding in the common case.
    if total % 512 == 0:
        lane = 512
    elif total % 256 == 0:
        lane = 256
    else:
        lane = 128

    o_flat = outputs.reshape(-1)   # reshape of contiguous array: no copy
    m_flat = masks.reshape(-1)

    padded_total = max(_round_up(total, lane), 8 * lane)
    pad = padded_total - total
    if pad:
        # Only when total isn't a multiple of 128 (rare) or the input is tiny.
        # Pad value is irrelevant: the kernel masks by the true element count.
        o_flat = jnp.pad(o_flat, (0, pad))
        m_flat = jnp.pad(m_flat, (0, pad))

    rows = padded_total // lane
    o2d = o_flat.reshape(rows, lane)
    m2d = m_flat.reshape(rows, lane)

    # Tile selection: <= 2 MiB (f32) per input block, aim for >= 2 row blocks
    # so the leading parallel axis can use both v7x TensorCores, never exceed
    # the (multiple-of-8) row count.
    tile_rows = max(8, min(
        _TARGET_BLOCK_BYTES // (lane * 4),
        _round_up(pl.cdiv(rows, 2), 32),
        (rows // 8) * 8,
    ))
    rows_blocks = pl.cdiv(rows, tile_rows)
    num_par = 2 if rows_blocks >= 2 else 1
    steps = pl.cdiv(rows_blocks, num_par)
    last_blk = rows_blocks - 1

    kernel = functools.partial(
        _tversky_partials_kernel,
        tile_rows=tile_rows, lane=lane, steps=steps, total=total)

    # Clamp overshoot block indices (num_par * steps may exceed rows_blocks by
    # <= 1); the re-read block is fully masked inside the kernel.
    in_spec = pl.BlockSpec(
        (tile_rows, lane),
        lambda p, s: (jnp.minimum(p * steps + s, last_blk), 0))
    # VMEM-resident accumulator: block index ignores the reduction axis.
    out_spec = pl.BlockSpec((None, 3, 8, lane), lambda p, s: (p, 0, 0, 0))
    out_shape = jax.ShapeDtypeStruct((num_par, 3, 8, lane), jnp.float32)

    bytes_accessed = int(o2d.size * o2d.dtype.itemsize
                         + m2d.size * m2d.dtype.itemsize
                         + num_par * 3 * 8 * lane * 4)

    parts = pl.pallas_call(
        kernel,
        out_shape=out_shape,
        grid_spec=pltpu.PrefetchScalarGridSpec(
            num_scalar_prefetch=0,
            grid=(num_par, steps),
            in_specs=[in_spec, in_spec],
            out_specs=out_spec,
        ),
        compiler_params=pltpu.CompilerParams(
            dimension_semantics=("parallel", "arbitrary"),
            vmem_limit_bytes=_VMEM_LIMIT_BYTES,
        ),
        cost_estimate=pl.CostEstimate(
            flops=5 * total,
            transcendentals=total,
            bytes_accessed=bytes_accessed,
        ),
    )(o2d, m2d)

    # Tiny final combine (num_par * 3 * 8 * lane elements) in the wrapper.
    tp = jnp.sum(parts[:, 0])
    so = jnp.sum(parts[:, 1])
    sm = jnp.sum(parts[:, 2])
    fp = so - tp                 # == sum((1 - m) * sigmoid(x))
    fn = sm - tp                 # == sum(m * (1 - sigmoid(x)))
    tversky = (tp + smooth) / (tp + alpha * fp + beta * fn + smooth)
    return 1.0 - tversky


def _reference(outputs, masks, alpha=0.2, beta=0.8, smooth=1.0):
    o = jnp.squeeze(jax.nn.sigmoid(outputs.astype(jnp.float32)), axis=1)
    m = jnp.squeeze(masks.astype(jnp.float32), axis=1)
    tp = jnp.sum(o * m)
    fp = jnp.sum((1 - m) * o)
    fn = jnp.sum(m * (1 - o))
    return 1 - (tp + smooth) / (tp + alpha * fp + beta * fn + smooth)


if __name__ == "__main__":
    key = jax.random.PRNGKey(0)
    k1, k2 = jax.random.split(key)
    N, C, H, W = 2, 1, 16, 16
    outputs = jax.random.normal(k1, (N, C, H, W), dtype=jnp.float32)
    masks = (jax.random.uniform(k2, (N, C, H, W)) > 0.5).astype(jnp.float32)

    loss = tversky_loss(outputs, masks)
    loss = jax.block_until_ready(loss)

    ref = _reference(outputs, masks)
    assert jnp.allclose(loss, ref, atol=1e-5, rtol=1e-5), (loss, ref)
    print("KERNEL_OK")
</pallas_src>

<mosaic_0001>
module attributes {stable_mosaic.version = 11 : i64} {
  func.func @_tversky_partials_kernel(%arg0: i32, %arg1: i32, %arg2: memref<8x512xf32, #tpu.memory_space<vmem>>, %arg3: memref<8x512xf32, #tpu.memory_space<vmem>>, %arg4: memref<1x3x8x512xf32, #tpu.memory_space<vmem>>) attributes {dimension_semantics = [#tpu.dimension_semantics<parallel>, #tpu.dimension_semantics<arbitrary>], iteration_bounds = array<i64: 1, 1>, scalar_prefetch = 0 : i64, scratch_operands = 0 : i64, tpu.core_type = #tpu.core_type<tc>, window_params = [{transform_indices = @transform_0, window_bounds = array<i64: 8, 512>}, {transform_indices = @transform_1, window_bounds = array<i64: 8, 512>}, {transform_indices = @transform_2, window_bounds = array<i64: 1, 3, 8, 512>}]} {
    %c1_i32 = arith.constant 1 : i32
    %0 = arith.muli %arg0, %c1_i32 : i32
    %1 = arith.addi %0, %arg1 : i32
    %c0_i32 = arith.constant 0 : i32
    %2 = arith.cmpi eq, %arg1, %c0_i32 : i32
    %3 = arith.extui %2 : i1 to i32
    %c0_i32_0 = arith.constant 0 : i32
    %4 = arith.cmpi ne, %3, %c0_i32_0 : i32
    scf.if %4 {
      %cst_8 = arith.constant 0.000000e+00 : f32
      %20 = vector.broadcast %cst_8 : f32 to vector<3x8x512xf32>
      %c0_9 = arith.constant 0 : index
      %c0_10 = arith.constant 0 : index
      %c0_11 = arith.constant 0 : index
      %c0_12 = arith.constant 0 : index
      %21 = vector.load %arg4[%c0_9, %c0_10, %c0_11, %c0_12] : memref<1x3x8x512xf32, #tpu.memory_space<vmem>>, vector<1x3x8x512xf32>
      %22 = vector.shape_cast %21 : vector<1x3x8x512xf32> to vector<3x8x512xf32>
      %23 = vector.shape_cast %20 : vector<3x8x512xf32> to vector<1x3x8x512xf32>
      tpu.vector_store %arg4[%c0_9, %c0_10, %c0_11, %c0_12], %23 {strides = array<i32>} : memref<1x3x8x512xf32, #tpu.memory_space<vmem>>, vector<1x3x8x512xf32>,
    } else {
    }
    %c0 = arith.constant 0 : index
    %c0_1 = arith.constant 0 : index
    %5 = vector.load %arg2[%c0, %c0_1] : memref<8x512xf32, #tpu.memory_space<vmem>>, vector<8x512xf32>
    %6 = arith.negf %5 : vector<8x512xf32>
    %7 = math.exp %6 : vector<8x512xf32>
    %cst = arith.constant 1.000000e+00 : f32
    %8 = vector.broadcast %cst : f32 to vector<8x512xf32>
    %9 = arith.addf %8, %7 : vector<8x512xf32>
    %10 = arith.divf %8, %9 : vector<8x512xf32>
    %c0_2 = arith.constant 0 : index
    %c0_3 = arith.constant 0 : index
    %11 = vector.load %arg3[%c0_2, %c0_3] : memref<8x512xf32, #tpu.memory_space<vmem>>, vector<8x512xf32>
    %c1_i32_4 = arith.constant 1 : i32
    %12 = arith.addi %1, %c1_i32_4 : i32
    %c8_i32 = arith.constant 8 : i32
    %13 = arith.muli %12, %c8_i32 : i32
    %c1_i32_5 = arith.constant 1 : i32
    %14 = arith.cmpi sle, %13, %c1_i32_5 : i32
    %15 = arith.extui %14 : i1 to i32
    %c0_i32_6 = arith.constant 0 : i32
    %16 = arith.cmpi ne, %15, %c0_i32_6 : i32
    scf.if %16 {
      %c0_8 = arith.constant 0 : index
      %c0_9 = arith.constant 0 : index
      %c0_10 = arith.constant 0 : index
      %c0_11 = arith.constant 0 : index
      %20 = vector.load %arg4[%c0_8, %c0_9, %c0_10, %c0_11] : memref<1x3x8x512xf32, #tpu.memory_space<vmem>>, vector<1x1x8x512xf32>
      %21 = vector.shape_cast %20 : vector<1x1x8x512xf32> to vector<8x512xf32>
      %22 = arith.mulf %10, %11 : vector<8x512xf32>
      %23 = vector.shape_cast %22 : vector<8x512xf32> to vector<1x8x512xf32>
      %cst_12 = arith.constant dense<0.000000e+00> : vector<8x512xf32>
      %24 = vector.multi_reduction <add>, %23, %cst_12 [0] : vector<1x8x512xf32> to vector<8x512xf32>
      %25 = arith.addf %21, %24 : vector<8x512xf32>
      %c0_13 = arith.constant 0 : index
      %c0_14 = arith.constant 0 : index
      %c0_15 = arith.constant 0 : index
      %c0_16 = arith.constant 0 : index
      %26 = vector.load %arg4[%c0_13, %c0_14, %c0_15, %c0_16] : memref<1x3x8x512xf32, #tpu.memory_space<vmem>>, vector<1x1x8x512xf32>
      %27 = vector.shape_cast %26 : vector<1x1x8x512xf32> to vector<8x512xf32>
      %28 = vector.shape_cast %25 : vector<8x512xf32> to vector<1x1x8x512xf32>
      tpu.vector_store %arg4[%c0_13, %c0_14, %c0_15, %c0_16], %28 {strides = array<i32>} : memref<1x3x8x512xf32, #tpu.memory_space<vmem>>, vector<1x1x8x512xf32>,
      %c0_17 = arith.constant 0 : index
      %c1 = arith.constant 1 : index
      %c0_18 = arith.constant 0 : index
      %c0_19 = arith.constant 0 : index
      %29 = vector.load %arg4[%c0_17, %c1, %c0_18, %c0_19] : memref<1x3x8x512xf32, #tpu.memory_space<vmem>>, vector<1x1x8x512xf32>
      %30 = vector.shape_cast %29 : vector<1x1x8x512xf32> to vector<8x512xf32>
      %31 = vector.shape_cast %10 : vector<8x512xf32> to vector<1x8x512xf32>
      %cst_20 = arith.constant dense<0.000000e+00> : vector<8x512xf32>
      %32 = vector.multi_reduction <add>, %31, %cst_20 [0] : vector<1x8x512xf32> to vector<8x512xf32>
      %33 = arith.addf %30, %32 : vector<8x512xf32>
      %c0_21 = arith.constant 0 : index
      %c1_22 = arith.constant 1 : index
      %c0_23 = arith.constant 0 : index
      %c0_24 = arith.constant 0 : index
      %34 = vector.load %arg4[%c0_21, %c1_22, %c0_23, %c0_24] : memref<1x3x8x512xf32, #tpu.memory_space<vmem>>, vector<1x1x8x512xf32>
      %35 = vector.shape_cast %34 : vector<1x1x8x512xf32> to vector<8x512xf32>
      %36 = vector.shape_cast %33 : vector<8x512xf32> to vector<1x1x8x512xf32>
      tpu.vector_store %arg4[%c0_21, %c1_22, %c0_23, %c0_24], %36 {strides = array<i32>} : memref<1x3x8x512xf32, #tpu.memory_space<vmem>>, vector<1x1x8x512xf32>,
      %c0_25 = arith.constant 0 : index
      %c2 = arith.constant 2 : index
      %c0_26 = arith.constant 0 : index
      %c0_27 = arith.constant 0 : index
      %37 = vector.load %arg4[%c0_25, %c2, %c0_26, %c0_27] : memref<1x3x8x512xf32, #tpu.memory_space<vmem>>, vector<1x1x8x512xf32>
      %38 = vector.shape_cast %37 : vector<1x1x8x512xf32> to vector<8x512xf32>
      %39 = vector.shape_cast %11 : vector<8x512xf32> to vector<1x8x512xf32>
      %cst_28 = arith.constant dense<0.000000e+00> : vector<8x512xf32>
      %40 = vector.multi_reduction <add>, %39, %cst_28 [0] : vector<1x8x512xf32> to vector<8x512xf32>
      %41 = arith.addf %38, %40 : vector<8x512xf32>
      %c0_29 = arith.constant 0 : index
      %c2_30 = arith.constant 2 : index
      %c0_31 = arith.constant 0 : index
      %c0_32 = arith.constant 0 : index
      %42 = vector.load %arg4[%c0_29, %c2_30, %c0_31, %c0_32] : memref<1x3x8x512xf32, #tpu.memory_space<vmem>>, vector<1x1x8x512xf32>
      %43 = vector.shape_cast %42 : vector<1x1x8x512xf32> to vector<8x512xf32>
      %44 = vector.shape_cast %41 : vector<8x512xf32> to vector<1x1x8x512xf32>
      tpu.vector_store %arg4[%c0_29, %c2_30, %c0_31, %c0_32], %44 {strides = array<i32>} : memref<1x3x8x512xf32, #tpu.memory_space<vmem>>, vector<1x1x8x512xf32>,
    } else {
    }
    %true = arith.constant true
    %17 = arith.xori %14, %true : i1
    %18 = arith.extui %17 : i1 to i32
    %c0_i32_7 = arith.constant 0 : i32
    %19 = arith.cmpi ne, %18, %c0_i32_7 : i32
    scf.if %19 {
      %20 = tpu.iota {dimensions = array<i32: 0>} : vector<8x512xi32>
      %c8_i32_8 = arith.constant 8 : i32
      %21 = arith.muli %1, %c8_i32_8 : i32
      %22 = vector.broadcast %21 : i32 to vector<8x512xi32>
      %23 = arith.addi %22, %20 : vector<8x512xi32>
      %c1_i32_9 = arith.constant 1 : i32
      %24 = vector.broadcast %c1_i32_9 : i32 to vector<8x512xi32>
      %25 = arith.cmpi slt, %23, %24 : vector<8x512xi32>
      %cst_10 = arith.constant 0.000000e+00 : f32
      %26 = vector.broadcast %cst_10 : f32 to vector<8x512xf32>
      %27 = arith.select %25, %10, %26 : vector<8x512xi1>, vector<8x512xf32>
      %cst_11 = arith.constant 0.000000e+00 : f32
      %28 = vector.broadcast %cst_11 : f32 to vector<8x512xf32>
      %29 = arith.select %25, %11, %28 : vector<8x512xi1>, vector<8x512xf32>
      %c0_12 = arith.constant 0 : index
      %c0_13 = arith.constant 0 : index
      %c0_14 = arith.constant 0 : index
      %c0_15 = arith.constant 0 : index
      %30 = vector.load %arg4[%c0_12, %c0_13, %c0_14, %c0_15] : memref<1x3x8x512xf32, #tpu.memory_space<vmem>>, vector<1x1x8x512xf32>
      %31 = vector.shape_cast %30 : vector<1x1x8x512xf32> to vector<8x512xf32>
      %32 = arith.mulf %27, %29 : vector<8x512xf32>
      %33 = vector.shape_cast %32 : vector<8x512xf32> to vector<1x8x512xf32>
      %cst_16 = arith.constant dense<0.000000e+00> : vector<8x512xf32>
      %34 = vector.multi_reduction <add>, %33, %cst_16 [0] : vector<1x8x512xf32> to vector<8x512xf32>
      %35 = arith.addf %31, %34 : vector<8x512xf32>
      %c0_17 = arith.constant 0 : index
      %c0_18 = arith.constant 0 : index
      %c0_19 = arith.constant 0 : index
      %c0_20 = arith.constant 0 : index
      %36 = vector.load %arg4[%c0_17, %c0_18, %c0_19, %c0_20] : memref<1x3x8x512xf32, #tpu.memory_space<vmem>>, vector<1x1x8x512xf32>
      %37 = vector.shape_cast %36 : vector<1x1x8x512xf32> to vector<8x512xf32>
      %38 = vector.shape_cast %35 : vector<8x512xf32> to vector<1x1x8x512xf32>
      tpu.vector_store %arg4[%c0_17, %c0_18, %c0_19, %c0_20], %38 {strides = array<i32>} : memref<1x3x8x512xf32, #tpu.memory_space<vmem>>, vector<1x1x8x512xf32>,
      %c0_21 = arith.constant 0 : index
      %c1 = arith.constant 1 : index
      %c0_22 = arith.constant 0 : index
      %c0_23 = arith.constant 0 : index
      %39 = vector.load %arg4[%c0_21, %c1, %c0_22, %c0_23] : memref<1x3x8x512xf32, #tpu.memory_space<vmem>>, vector<1x1x8x512xf32>
      %40 = vector.shape_cast %39 : vector<1x1x8x512xf32> to vector<8x512xf32>
      %41 = vector.shape_cast %27 : vector<8x512xf32> to vector<1x8x512xf32>
      %cst_24 = arith.constant dense<0.000000e+00> : vector<8x512xf32>
      %42 = vector.multi_reduction <add>, %41, %cst_24 [0] : vector<1x8x512xf32> to vector<8x512xf32>
      %43 = arith.addf %40, %42 : vector<8x512xf32>
      %c0_25 = arith.constant 0 : index
      %c1_26 = arith.constant 1 : index
      %c0_27 = arith.constant 0 : index
      %c0_28 = arith.constant 0 : index
      %44 = vector.load %arg4[%c0_25, %c1_26, %c0_27, %c0_28] : memref<1x3x8x512xf32, #tpu.memory_space<vmem>>, vector<1x1x8x512xf32>
      %45 = vector.shape_cast %44 : vector<1x1x8x512xf32> to vector<8x512xf32>
      %46 = vector.shape_cast %43 : vector<8x512xf32> to vector<1x1x8x512xf32>
      tpu.vector_store %arg4[%c0_25, %c1_26, %c0_27, %c0_28], %46 {strides = array<i32>} : memref<1x3x8x512xf32, #tpu.memory_space<vmem>>, vector<1x1x8x512xf32>,
      %c0_29 = arith.constant 0 : index
      %c2 = arith.constant 2 : index
      %c0_30 = arith.constant 0 : index
      %c0_31 = arith.constant 0 : index
      %47 = vector.load %arg4[%c0_29, %c2, %c0_30, %c0_31] : memref<1x3x8x512xf32, #tpu.memory_space<vmem>>, vector<1x1x8x512xf32>
      %48 = vector.shape_cast %47 : vector<1x1x8x512xf32> to vector<8x512xf32>
      %49 = vector.shape_cast %29 : vector<8x512xf32> to vector<1x8x512xf32>
      %cst_32 = arith.constant dense<0.000000e+00> : vector<8x512xf32>
      %50 = vector.multi_reduction <add>, %49, %cst_32 [0] : vector<1x8x512xf32> to vector<8x512xf32>
      %51 = arith.addf %48, %50 : vector<8x512xf32>
      %c0_33 = arith.constant 0 : index
      %c2_34 = arith.constant 2 : index
      %c0_35 = arith.constant 0 : index
      %c0_36 = arith.constant 0 : index
      %52 = vector.load %arg4[%c0_33, %c2_34, %c0_35, %c0_36] : memref<1x3x8x512xf32, #tpu.memory_space<vmem>>, vector<1x1x8x512xf32>
      %53 = vector.shape_cast %52 : vector<1x1x8x512xf32> to vector<8x512xf32>
      %54 = vector.shape_cast %51 : vector<8x512xf32> to vector<1x1x8x512xf32>
      tpu.vector_store %arg4[%c0_33, %c2_34, %c0_35, %c0_36], %54 {strides = array<i32>} : memref<1x3x8x512xf32, #tpu.memory_space<vmem>>, vector<1x1x8x512xf32>,
    } else {
    }
    return
  }
  func.func @transform_0(%arg0: i32, %arg1: i32) -> (i32, i32) {
    %c1_i32 = arith.constant 1 : i32
    %0 = arith.muli %arg0, %c1_i32 : i32
    %1 = arith.addi %0, %arg1 : i32
    %c0_i32 = arith.constant 0 : i32
    %2 = arith.minsi %1, %c0_i32 : i32
    %c0_i32_0 = arith.constant 0 : i32
    %c0_i32_1 = arith.constant 0 : i32
    return %2, %c0_i32_0 : i32, i32
  }
  func.func @transform_1(%arg0: i32, %arg1: i32) -> (i32, i32) {
    %c1_i32 = arith.constant 1 : i32
    %0 = arith.muli %arg0, %c1_i32 : i32
    %1 = arith.addi %0, %arg1 : i32
    %c0_i32 = arith.constant 0 : i32
    %2 = arith.minsi %1, %c0_i32 : i32
    %c0_i32_0 = arith.constant 0 : i32
    %c0_i32_1 = arith.constant 0 : i32
    return %2, %c0_i32_0 : i32, i32
  }
  func.func @transform_2(%arg0: i32, %arg1: i32) -> (i32, i32, i32, i32) {
    %c0_i32 = arith.constant 0 : i32
    %c0_i32_0 = arith.constant 0 : i32
    %c0_i32_1 = arith.constant 0 : i32
    %c0_i32_2 = arith.constant 0 : i32
    return %arg0, %c0_i32, %c0_i32_0, %c0_i32_1 : i32, i32, i32, i32
  }
}

</mosaic_0001>

<llo_original>
// kernel: tpu_custom_call.1
$region0: #{tpu_custom_call.1}
  #allocation0 [shape = 'u32[]', space=smem, size = 0x4, offset = 0x4, fixed_abs, tag = 'smem constant byte address 0x4 - core index']
  #allocation1 [shape = 'u32[144,128]{1,0:T(1,128)}', space=vmem, size = 0x12000, scoped, tag = 'internal scratch']
  %s0 = inlined_call_operand.hbm [shape: f32[8,512], index: 0, kind: input, shape index: {}]
  %s1 = inlined_call_operand.hbm [shape: f32[8,512], index: 1, kind: input, shape index: {}]
  %s2 = inlined_call_operand.hbm [shape: f32[1,3,8,512], index: 2, kind: output, shape index: {}]
  %s3 = sld [smem:[#allocation0]]
  $region38: #{tpu_custom_call.1} parent=0
    _
  %s5 = ssub.s32 1, %s3
  %s6 = scalar_select 0, %s5, %s3
  $region1: #{tpu_custom_call.1} parent=0
    #allocation2 [shape = 'u8[16384]{0}', space=vmem, size = 0x4000, scoped, tag = 'input window, operand 0, single buffered']
    #allocation3 [shape = 's32[1]{0}', space=sflag, size = 0x4, scoped, tag = 'scoped memory for tpu_custom_call.1']
    #allocation4 [shape = 's32[1]{0}', space=sflag, size = 0x4, scoped, tag = 'scoped memory for tpu_custom_call.1']
    #allocation5 [shape = 'u8[16384]{0}', space=vmem, size = 0x4000, scoped, tag = 'input window, operand 1, single buffered']
    #allocation6 [shape = 's32[1]{0}', space=sflag, size = 0x4, scoped, tag = 'scoped memory for tpu_custom_call.1']
    #allocation7 [shape = 'u8[49152]{0}', space=vmem, size = 0xc000, scoped, tag = 'output window, operand 0, single buffered']
    %7 = vsyncpa [#allocation3], 0
    %8 = vsyncpa [#allocation6], 0
    %9 = vsyncpa [#allocation4], 0
    // Predicated region
    $region2: #{tpu_custom_call.1} parent=1 // pred_check
      _
    $region3: #{tpu_custom_call.1} parent=1 // pred_check_branch
      %11 = sbr.rel (0) target = $region5
    $region4: #{tpu_custom_call.1} parent=1 // pred_region
      %s12 = sadd.s32 0, 0
      %p13 = scmp.lt.s32.totalorder %s12, 0
      %s14 = scalar_select %p13, %s12, 0
      %s16 = ssub.s32 512, 512
      %17 = vsyncadd [#allocation3], %s16
      %s18 = smul.addr %s14, 4
      %s19 = smul.addr %s18, 128
      %s20 = scalar_lea.hbm %s0, %s19
      %s22 = sshll.u32 [#allocation2], 4
      %s23 = int_to_ptr.vmem [resolvable:$true] %s22
      %25 = dma.hbm_to_vmem [thread:$0]  %s20, 512, %s23, [#allocation3]
    $region5: #{tpu_custom_call.1} parent=1 // pred_fallthru
      _
    // Predicated region
    $region6: #{tpu_custom_call.1} parent=1 // pred_check
      _
    $region7: #{tpu_custom_call.1} parent=1 // pred_check_branch
      %27 = sbr.rel (0) target = $region9
    $region8: #{tpu_custom_call.1} parent=1 // pred_region
      %s28 = sadd.s32 0, 0
      %p29 = scmp.lt.s32.totalorder %s28, 0
      %s30 = scalar_select %p29, %s28, 0
      %s32 = ssub.s32 512, 512
      %33 = vsyncadd [#allocation6], %s32
      %s34 = smul.addr %s30, 4
      %s35 = smul.addr %s34, 128
      %s36 = scalar_lea.hbm %s1, %s35
      %s38 = sshll.u32 [#allocation5], 4
      %s39 = int_to_ptr.vmem [resolvable:$true] %s38
      %41 = dma.hbm_to_vmem [thread:$0]  %s36, 512, %s39, [#allocation6]
    $region9: #{tpu_custom_call.1} parent=1 // pred_fallthru
      _
    // Predicated region
    $region10: #{tpu_custom_call.1} parent=1 // pred_check
      _
    $region11: #{tpu_custom_call.1} parent=1 // pred_check_branch
      %43 = sbr.rel (0) target = $region13
    $region12: #{tpu_custom_call.1} parent=1 // pred_region
      %44 = dma.done [#allocation3], 512
    $region13: #{tpu_custom_call.1} parent=1 // pred_fallthru
      _
    // Predicated region
    $region14: #{tpu_custom_call.1} parent=1 // pred_check
      _
    $region15: #{tpu_custom_call.1} parent=1 // pred_check_branch
      %46 = sbr.rel (0) target = $region17
    $region16: #{tpu_custom_call.1} parent=1 // pred_region
      %47 = dma.done [#allocation6], 512
    $region17: #{tpu_custom_call.1} parent=1 // pred_fallthru
      _
    %s48 = sadd.s32 0, 0
    %p49 = scmp.lt.s32.totalorder %s48, 0
    %s50 = scalar_select %p49, %s48, 0
    %s51 = sadd.s32 0, 0
    %p52 = scmp.lt.s32.totalorder %s51, 0
    %s53 = scalar_select %p52, %s51, 0
    %s54 = sadd.s32 0, 0
    %p55 = scmp.eq.s32.totalorder 0, 0
    // Predicated region
    $region18: #{tpu_custom_call.1} parent=1 // pred_check
      %p56 = pneg %p55
    $region19: #{tpu_custom_call.1} parent=1 // pred_check_branch
      %58 = sbr.rel (%p56) target = $region21
    $region20: #{tpu_custom_call.1} parent=1 // pred_region
      %59 = vst [vmem:[#allocation7] sm:$0xff] 0.0
      %60 = vst [vmem:[#allocation7 + $0x8] sm:$0xff] 0.0
      %61 = vst [vmem:[#allocation7 + $0x10] sm:$0xff] 0.0
      %62 = vst [vmem:[#allocation7 + $0x18] sm:$0xff] 0.0
      %63 = vst [vmem:[#allocation7 + $0x20] sm:$0xff] 0.0
      %64 = vst [vmem:[#allocation7 + $0x28] sm:$0xff] 0.0
      %65 = vst [vmem:[#allocation7 + $0x30] sm:$0xff] 0.0
      %66 = vst [vmem:[#allocation7 + $0x38] sm:$0xff] 0.0
      %67 = vst [vmem:[#allocation7 + $0x40] sm:$0xff] 0.0
      %68 = vst [vmem:[#allocation7 + $0x48] sm:$0xff] 0.0
      %69 = vst [vmem:[#allocation7 + $0x50] sm:$0xff] 0.0
      %70 = vst [vmem:[#allocation7 + $0x58] sm:$0xff] 0.0
    $region21: #{tpu_custom_call.1} parent=1 // pred_fallthru
      _
    %v71 = vld [vmem:[#allocation2] sm:$0xff]
    %v72 = vld [vmem:[#allocation2 + $0x8] sm:$0xff]
    %v73 = vld [vmem:[#allocation2 + $0x10] sm:$0xff]
    %v74 = vld [vmem:[#allocation2 + $0x18] sm:$0xff]
    %v75 = vxor.u32 %v71, 2147483648
    %v76 = vxor.u32 %v72, 2147483648
    %v77 = vxor.u32 %v73, 2147483648
    %v78 = vxor.u32 %v74, 2147483648
    %v79 = vmul.f32 %v75, 1.442695
    %v80 = vpow.pop %v79
    %v81 = vmul.f32 %v76, 1.442695
    %v82 = vpow.pop %v81
    %v83 = vmul.f32 %v77, 1.442695
    %v84 = vpow.pop %v83
    %v85 = vmul.f32 %v78, 1.442695
    %v86 = vpow.pop %v85
    %v87 = vadd.f32 %v80, 1.0
    %v88 = vadd.f32 %v82, 1.0
    %v89 = vadd.f32 %v84, 1.0
    %v90 = vadd.f32 %v86, 1.0
    %v91 = vrcp.pop %v87
    %v92 = vmul.f32 1.0, %v91
    %v93 = vrcp.pop %v88
    %v94 = vmul.f32 1.0, %v93
    %v95 = vrcp.pop %v89
    %v96 = vmul.f32 1.0, %v95
    %v97 = vrcp.pop %v90
    %v98 = vmul.f32 1.0, %v97
    %v99 = vld [vmem:[#allocation5] sm:$0xff]
    %v100 = vld [vmem:[#allocation5 + $0x8] sm:$0xff]
    %v101 = vld [vmem:[#allocation5 + $0x10] sm:$0xff]
    %v102 = vld [vmem:[#allocation5 + $0x18] sm:$0xff]
    %s103 = sadd.s32 %s54, 1
    %s104 = smul.u32 %s103, 8
    %p105 = scmp.le.s32.totalorder %s104, 1
    // Predicated region
    $region22: #{tpu_custom_call.1} parent=1 // pred_check
      %p106 = pneg %p105
    $region23: #{tpu_custom_call.1} parent=1 // pred_check_branch
      %108 = sbr.rel (%p106) target = $region25
    $region24: #{tpu_custom_call.1} parent=1 // pred_region
      %v109 = vld [vmem:[#allocation7] sm:$0xff]
      %v110 = vld [vmem:[#allocation7 + $0x8] sm:$0xff]
      %v111 = vld [vmem:[#allocation7 + $0x10] sm:$0xff]
      %v112 = vld [vmem:[#allocation7 + $0x18] sm:$0xff]
      %v113 = vmul.f32 %v92, %v99
      %v114 = vmul.f32 %v94, %v100
      %v115 = vmul.f32 %v96, %v101
      %v116 = vmul.f32 %v98, %v102
      %v117 = vadd.f32 %v113, 0.0
      %v118 = vadd.f32 %v114, 0.0
      %v119 = vadd.f32 %v115, 0.0
      %v120 = vadd.f32 %v116, 0.0
      %v121 = vadd.f32 %v109, %v117
      %v122 = vadd.f32 %v110, %v118
      %v123 = vadd.f32 %v111, %v119
      %v124 = vadd.f32 %v112, %v120
      %125 = vst [vmem:[#allocation7] sm:$0xff] %v121
      %126 = vst [vmem:[#allocation7 + $0x8] sm:$0xff] %v122
      %127 = vst [vmem:[#allocation7 + $0x10] sm:$0xff] %v123
      %128 = vst [vmem:[#allocation7 + $0x18] sm:$0xff] %v124
      %s129 = scalar_lea.vmem [#allocation7], 32
      %v130 = vld [vmem:[%s129] sm:$0xff]
      %v131 = vld [vmem:[%s129 + $0x8] sm:$0xff]
      %v132 = vld [vmem:[%s129 + $0x10] sm:$0xff]
      %v133 = vld [vmem:[%s129 + $0x18] sm:$0xff]
      %v134 = vadd.f32 %v92, 0.0
      %v135 = vadd.f32 %v94, 0.0
      %v136 = vadd.f32 %v96, 0.0
      %v137 = vadd.f32 %v98, 0.0
      %v138 = vadd.f32 %v130, %v134
      %v139 = vadd.f32 %v131, %v135
      %v140 = vadd.f32 %v132, %v136
      %v141 = vadd.f32 %v133, %v137
      %142 = vst [vmem:[%s129] sm:$0xff] %v138
      %143 = vst [vmem:[%s129 + $0x8] sm:$0xff] %v139
      %144 = vst [vmem:[%s129 + $0x10] sm:$0xff] %v140
      %145 = vst [vmem:[%s129 + $0x18] sm:$0xff] %v141
      %s146 = scalar_lea.vmem [#allocation7], 64
      %v147 = vld [vmem:[%s146] sm:$0xff]
      %v148 = vld [vmem:[%s146 + $0x8] sm:$0xff]
      %v149 = vld [vmem:[%s146 + $0x10] sm:$0xff]
      %v150 = vld [vmem:[%s146 + $0x18] sm:$0xff]
      %v151 = vadd.f32 %v99, 0.0
      %v152 = vadd.f32 %v100, 0.0
      %v153 = vadd.f32 %v101, 0.0
      %v154 = vadd.f32 %v102, 0.0
      %v155 = vadd.f32 %v147, %v151
      %v156 = vadd.f32 %v148, %v152
      %v157 = vadd.f32 %v149, %v153
      %v158 = vadd.f32 %v150, %v154
      %159 = vst [vmem:[%s146] sm:$0xff] %v155
      %160 = vst [vmem:[%s146 + $0x8] sm:$0xff] %v156
      %161 = vst [vmem:[%s146 + $0x10] sm:$0xff] %v157
      %162 = vst [vmem:[%s146 + $0x18] sm:$0xff] %v158
    $region25: #{tpu_custom_call.1} parent=1 // pred_fallthru
      _
    %p163 = scmp.gt.s32.totalorder %s104, 1
    // Predicated region
    $region26: #{tpu_custom_call.1} parent=1 // pred_check
      %p164 = pneg %p163
    $region27: #{tpu_custom_call.1} parent=1 // pred_check_branch
      %166 = sbr.rel (%p164) target = $region29
    $region28: #{tpu_custom_call.1} parent=1 // pred_region
      %v167 = vlaneseq
      %v168 = vshrl.u32 %v167, 7
      %s169 = smul.u32 %s54, 8
      %v170 = vstv %s169
      %v171 = vadd.s32 %v170, %v168
      %vm172 = vcmp.lt.s32.totalorder %v171, 1
      %v173 = vsel %vm172, %v92, 0.0
      %v174 = vsel %vm172, %v94, 0.0
      %v175 = vsel %vm172, %v96, 0.0
      %v176 = vsel %vm172, %v98, 0.0
      %v177 = vsel %vm172, %v99, 0.0
      %v178 = vsel %vm172, %v100, 0.0
      %v179 = vsel %vm172, %v101, 0.0
      %v180 = vsel %vm172, %v102, 0.0
      %v181 = vld [vmem:[#allocation7] sm:$0xff]
      %v182 = vld [vmem:[#allocation7 + $0x8] sm:$0xff]
      %v183 = vld [vmem:[#allocation7 + $0x10] sm:$0xff]
      %v184 = vld [vmem:[#allocation7 + $0x18] sm:$0xff]
      %v185 = vmul.f32 %v173, %v177
      %v186 = vmul.f32 %v174, %v178
      %v187 = vmul.f32 %v175, %v179
      %v188 = vmul.f32 %v176, %v180
      %v189 = vadd.f32 %v185, 0.0
      %v190 = vadd.f32 %v186, 0.0
      %v191 = vadd.f32 %v187, 0.0
      %v192 = vadd.f32 %v188, 0.0
      %v193 = vadd.f32 %v181, %v189
      %v194 = vadd.f32 %v182, %v190
      %v195 = vadd.f32 %v183, %v191
      %v196 = vadd.f32 %v184, %v192
      %197 = vst [vmem:[#allocation7] sm:$0xff] %v193
      %198 = vst [vmem:[#allocation7 + $0x8] sm:$0xff] %v194
      %199 = vst [vmem:[#allocation7 + $0x10] sm:$0xff] %v195
      %200 = vst [vmem:[#allocation7 + $0x18] sm:$0xff] %v196
      %s201 = scalar_lea.vmem [#allocation7], 32
      %v202 = vld [vmem:[%s201] sm:$0xff]
      %v203 = vld [vmem:[%s201 + $0x8] sm:$0xff]
      %v204 = vld [vmem:[%s201 + $0x10] sm:$0xff]
      %v205 = vld [vmem:[%s201 + $0x18] sm:$0xff]
      %v206 = vadd.f32 %v173, 0.0
      %v207 = vadd.f32 %v174, 0.0
      %v208 = vadd.f32 %v175, 0.0
      %v209 = vadd.f32 %v176, 0.0
      %v210 = vadd.f32 %v202, %v206
      %v211 = vadd.f32 %v203, %v207
      %v212 = vadd.f32 %v204, %v208
      %v213 = vadd.f32 %v205, %v209
      %214 = vst [vmem:[%s201] sm:$0xff] %v210
      %215 = vst [vmem:[%s201 + $0x8] sm:$0xff] %v211
      %216 = vst [vmem:[%s201 + $0x10] sm:$0xff] %v212
      %217 = vst [vmem:[%s201 + $0x18] sm:$0xff] %v213
      %s218 = scalar_lea.vmem [#allocation7], 64
      %v219 = vld [vmem:[%s218] sm:$0xff]
      %v220 = vld [vmem:[%s218 + $0x8] sm:$0xff]
      %v221 = vld [vmem:[%s218 + $0x10] sm:$0xff]
      %v222 = vld [vmem:[%s218 + $0x18] sm:$0xff]
      %v223 = vadd.f32 %v177, 0.0
      %v224 = vadd.f32 %v178, 0.0
      %v225 = vadd.f32 %v179, 0.0
      %v226 = vadd.f32 %v180, 0.0
      %v227 = vadd.f32 %v219, %v223
      %v228 = vadd.f32 %v220, %v224
      %v229 = vadd.f32 %v221, %v225
      %v230 = vadd.f32 %v222, %v226
      %231 = vst [vmem:[%s218] sm:$0xff] %v227
      %232 = vst [vmem:[%s218 + $0x8] sm:$0xff] %v228
      %233 = vst [vmem:[%s218 + $0x10] sm:$0xff] %v229
      %234 = vst [vmem:[%s218 + $0x18] sm:$0xff] %v230
    $region29: #{tpu_custom_call.1} parent=1 // pred_fallthru
      _
    // Predicated region
    $region30: #{tpu_custom_call.1} parent=1 // pred_check
      _
    $region31: #{tpu_custom_call.1} parent=1 // pred_check_branch
      %236 = sbr.rel (0) target = $region33
    $region32: #{tpu_custom_call.1} parent=1 // pred_region
      %s238 = ssub.s32 1536, 1536
      %239 = vsyncadd [#allocation4], %s238
      %s240 = sshll.u32 [#allocation7], 4
      %s241 = int_to_ptr.vmem [resolvable:$true] %s240
      %246 = dma.vmem_to_hbm [thread:$0]  %s241, 1536, %s2, [#allocation4], 512, 512, 32
    $region33: #{tpu_custom_call.1} parent=1 // pred_fallthru
      _
    // Predicated region
    $region34: #{tpu_custom_call.1} parent=1 // pred_check
      _
    $region35: #{tpu_custom_call.1} parent=1 // pred_check_branch
      %248 = sbr.rel (0) target = $region37
    $region36: #{tpu_custom_call.1} parent=1 // pred_region
      %249 = dma.done [#allocation4], 1536
    $region37: #{tpu_custom_call.1} parent=1 // pred_fallthru
      _
    %250 = vsyncpa [#allocation3], 1
    %251 = vsyncpa [#allocation6], 1
    %252 = vsyncpa [#allocation4], 1

</llo_original>
